<compile_context>
chip_gen: v7x
topology: tpu7x:2x2x1
jax: 0.10.0
libtpu: 0.0.40
codegen_flags: <defaults>
</compile_context>

<pallas_src>
import numpy as np
import jax
import jax.numpy as jnp
from jax import lax
from jax.experimental import pallas as pl
from jax.experimental.pallas import tpu as pltpu


# ----------------------------- helpers / fixed parameters -------------------

def _round_up(v, m):
    return ((v + m - 1) // m) * m


def _hann_window(win_length):
    # periodic hann (torch.hann_window default)
    n = np.arange(win_length, dtype=np.float64)
    return (0.5 - 0.5 * np.cos(2.0 * np.pi * n / win_length)).astype(np.float32)


def _dft_matrices(n_fft):
    # Real / imaginary parts of the DFT for the one-sided spectrum.
    n_freq = n_fft // 2 + 1
    n = np.arange(n_fft, dtype=np.float64)[:, None]             # (n_fft, 1)
    k = np.arange(n_freq, dtype=np.float64)[None, :]            # (1, n_freq)
    ang = 2.0 * np.pi * n * k / n_fft
    return np.cos(ang).astype(np.float32), (-np.sin(ang)).astype(np.float32)


def _mel_filterbank(sr, n_fft, n_mels):
    # torchaudio default: HTK mel scale, norm=None.
    n_freq = n_fft // 2 + 1
    f_min, f_max = 0.0, sr / 2.0

    def hz_to_mel(f):
        return 2595.0 * np.log10(1.0 + f / 700.0)

    def mel_to_hz(m):
        return 700.0 * (10.0 ** (m / 2595.0) - 1.0)

    m_pts = np.linspace(hz_to_mel(f_min), hz_to_mel(f_max), n_mels + 2)
    f_pts = mel_to_hz(m_pts)                                     # (n_mels + 2,)
    all_freqs = np.linspace(0.0, sr / 2.0, n_freq)               # (n_freq,)
    f_diff = f_pts[1:] - f_pts[:-1]                              # (n_mels + 1,)
    slopes = f_pts[None, :] - all_freqs[:, None]                 # (n_freq, n_mels + 2)
    down = -slopes[:, :-2] / f_diff[:-1]
    up = slopes[:, 2:] / f_diff[1:]
    return np.maximum(0.0, np.minimum(down, up)).astype(np.float32)   # (n_freq, n_mels)


# ----------------------------- Pallas kernel --------------------------------

def _make_kernel(*, t_tile, nf_pad, n_mels, n_mels_pad, t_valid):
    def kernel(slab_ref, dftw_ref, fb_ref, out_ref, sums_ref):
        # slab_ref : (hop, t_tile + 8)     bf16  chunked+transposed waveform slab
        # dftw_ref : (2*nf_pad, 3*hop)     bf16  window-folded [cos ; -sin] DFT^T
        # fb_ref   : (n_mels_pad, nf_pad)  bf16  mel filterbank^T (zero-padded)
        # out_ref  : (n_mels, t_tile)      f32   log-mel tile
        # sums_ref : (n_mels_pad, 1)       f32   per-tile partial sums (for CMN)
        slab = slab_ref[...]
        # In-VMEM framing: frame i, chunk-offset c -> slab[:, i + c].  Lane shifts
        # by 0/1/2 plus a sublane-aligned concat replace the 2.5x-expanded HBM
        # frames array of the previous version.
        frames_t = jnp.concatenate(
            [slab[:, c:c + t_tile] for c in range(3)], axis=0)       # (3*hop, t_tile)
        # Single fused MXU matmul: [Re ; Im] one-sided spectrum, f32 accumulation.
        reim = jnp.dot(dftw_ref[...], frames_t,
                       preferred_element_type=jnp.float32)            # (2*nf_pad, t_tile)
        re = reim[:nf_pad]
        im = reim[nf_pad:]
        power = re * re + im * im                                      # (nf_pad, t_tile) f32
        # Mel projection in bf16 (f32 accumulation) to avoid multi-pass f32 MXU
        # emulation; mel rows padded to 128 for clean MXU/vreg tiles.
        mel = jnp.dot(fb_ref[...], power.astype(jnp.bfloat16),
                      preferred_element_type=jnp.float32)               # (n_mels_pad, t_tile)
        logmel = jnp.log10(mel + 1e-8)
        # Sublane prefix slice 128 -> 80 is free; lane dim (t_tile) stays 128-dense.
        out_ref[...] = logmel[:n_mels].astype(out_ref.dtype)
        # Per-tile per-bin partial sums over VALID frames only, so the wrapper CMN
        # mean does not need an extra full read of the output.
        col = (lax.broadcasted_iota(jnp.int32, (1, t_tile), 1)
               + pl.program_id(1) * t_tile)
        masked = jnp.where(col < t_valid, logmel, 0.0)
        sums_ref[...] = jnp.sum(masked, axis=1, keepdims=True)
    return kernel


# ----------------------------- wrapper ---------------------------------------

def log_mel_spectrogram(x, n_fft=400, hop_length=160, win_length=400,
                        n_mels=80, sr=16000, t_tile_max=1024):
    """x: (B, L) float32 waveform -> (B, n_mels, T) float32 log-mel features."""
    assert win_length == n_fft, "demo assumes win_length == n_fft"
    assert n_fft <= 3 * hop_length, "framing decomposition assumes n_fft <= 3*hop"
    B, L = x.shape
    n_freq = n_fft // 2 + 1
    nf_pad = _round_up(n_freq, 128)            # 201 -> 256
    n_mels_pad = _round_up(n_mels, 128)        # 80  -> 128
    T = 1 + L // hop_length                    # center=True framing

    # Adaptive time tile (multiple of 128): big enough to amortize grid-step
    # overhead, split when B==1 would otherwise leave one TensorCore idle.
    t_tile = min(t_tile_max, _round_up(T, 128))
    if B == 1 and t_tile >= _round_up(T, 128) and t_tile > 128:
        t_tile = max(128, _round_up(-(-T // 2), 128))
    n_tiles = _round_up(T, t_tile) // t_tile
    T_pad = n_tiles * t_tile

    # --- glue (plain JAX): RMS normalize (f32), reflect pad, chunk, tile ------
    # TODO(synk): rms_normalize / mean_norm are not defined in the source file;
    #             per-waveform RMS norm and per-bin CMN over time are assumed.
    x = x.astype(jnp.float32)
    rms = jnp.sqrt(jnp.mean(x * x, axis=-1, keepdims=True))
    x = (x / (rms + 1e-8)).astype(jnp.bfloat16)      # bf16 early: halves wrapper HBM bytes

    pad = n_fft // 2
    xp = jnp.pad(x, ((0, 0), (pad, pad)), mode="reflect")          # (B, L + n_fft)
    total = (T_pad + 8) * hop_length
    xp = jnp.pad(xp, ((0, 0), (0, total - xp.shape[1])))           # zero pad tail
    chunks = xp.reshape(B, T_pad + 8, hop_length)
    # Per-tile overlapping chunk slabs: only 8 extra hop-rows duplicated per tile
    # (<1% at t_tile=1024) — the 2.5x frames array is never materialized in HBM.
    slabs = jnp.stack(
        [chunks[:, i * t_tile:i * t_tile + t_tile + 8] for i in range(n_tiles)],
        axis=1)                                                     # (B, n_tiles, t_tile+8, hop)
    slabs_t = jnp.swapaxes(slabs, 2, 3)                             # (B, n_tiles, hop, t_tile+8)

    # --- deterministic fixed parameters (window folded in, transposed, padded) --
    win = _hann_window(win_length)                                   # (n_fft,)
    cos_m, sin_m = _dft_matrices(n_fft)                              # (n_fft, n_freq)
    dftw_np = np.zeros((2 * nf_pad, 3 * hop_length), dtype=np.float32)
    dftw_np[:n_freq, :n_fft] = (win[:, None] * cos_m).T
    dftw_np[nf_pad:nf_pad + n_freq, :n_fft] = (win[:, None] * sin_m).T
    dftw_t = jnp.asarray(dftw_np, dtype=jnp.bfloat16)                # (2*nf_pad, 3*hop)

    fb_np = np.zeros((n_mels_pad, nf_pad), dtype=np.float32)
    fb_np[:n_mels, :n_freq] = _mel_filterbank(sr, n_fft, n_mels).T
    fb_t = jnp.asarray(fb_np, dtype=jnp.bfloat16)                    # (n_mels_pad, nf_pad)

    kernel = _make_kernel(t_tile=t_tile, nf_pad=nf_pad, n_mels=n_mels,
                          n_mels_pad=n_mels_pad, t_valid=T)

    # --- Pallas call: grid over (batch, time-tiles), both parallel -------------
    out, tile_sums = pl.pallas_call(
        kernel,
        out_shape=(
            jax.ShapeDtypeStruct((B, n_mels, T_pad), jnp.float32),
            jax.ShapeDtypeStruct((B, n_tiles, n_mels_pad, 1), jnp.float32),
        ),
        grid=(B, n_tiles),
        in_specs=[
            pl.BlockSpec((None, None, hop_length, t_tile + 8),
                         lambda b, t: (b, t, 0, 0)),                 # chunk slab tile
            pl.BlockSpec((2 * nf_pad, 3 * hop_length), lambda b, t: (0, 0)),  # fused DFT
            pl.BlockSpec((n_mels_pad, nf_pad), lambda b, t: (0, 0)),          # mel fbank
        ],
        out_specs=(
            pl.BlockSpec((None, n_mels, t_tile), lambda b, t: (b, 0, t)),
            pl.BlockSpec((None, None, n_mels_pad, 1), lambda b, t: (b, t, 0, 0)),
        ),
        compiler_params=pltpu.CompilerParams(
            dimension_semantics=("parallel", "parallel"),
            vmem_limit_bytes=32 * 1024 * 1024),
    )(slabs_t, dftw_t, fb_t)

    # --- strip time padding; per-mel-bin CMN from the in-kernel partial sums ---
    out = out[:, :, :T]
    mean = jnp.sum(tile_sums[:, :, :n_mels, 0], axis=1) / T          # (B, n_mels)
    return out - mean[:, :, None]


# ----------------------------- demo -------------------------------------------

if __name__ == "__main__":
    key = jax.random.PRNGKey(0)
    B, L = 2, 1600                       # T = 1 + 1600 // 160 = 11 frames
    x = jax.random.normal(key, (B, L), dtype=jnp.float32)

    fn = jax.jit(log_mel_spectrogram)
    out = jax.block_until_ready(fn(x))

    assert out.shape == (B, 80, 1 + L // 160), out.shape
    assert out.dtype == jnp.float32
    assert bool(jnp.all(jnp.isfinite(out)))
    print("KERNEL_OK")
</pallas_src>

<mosaic_0001>
module attributes {stable_mosaic.version = 11 : i64} {
  func.func @kernel(%arg0: i32, %arg1: i32, %arg2: memref<1x1x160x136xbf16, #tpu.memory_space<vmem>>, %arg3: memref<512x480xbf16, #tpu.memory_space<vmem>>, %arg4: memref<128x256xbf16, #tpu.memory_space<vmem>>, %arg5: memref<1x80x128xf32, #tpu.memory_space<vmem>>, %arg6: memref<1x1x128x1xf32, #tpu.memory_space<vmem>>) attributes {dimension_semantics = [#tpu.dimension_semantics<parallel>, #tpu.dimension_semantics<parallel>], iteration_bounds = array<i64: 2, 1>, scalar_prefetch = 0 : i64, scratch_operands = 0 : i64, tpu.core_type = #tpu.core_type<tc>, window_params = [{transform_indices = @transform_0, window_bounds = array<i64: 1, 1, 160, 136>}, {pipeline_mode = #tpu.pipeline_mode<synchronous>, transform_indices = @transform_1, window_bounds = array<i64: 512, 480>}, {pipeline_mode = #tpu.pipeline_mode<synchronous>, transform_indices = @transform_2, window_bounds = array<i64: 128, 256>}, {transform_indices = @transform_3, window_bounds = array<i64: 1, 80, 128>}, {transform_indices = @transform_4, window_bounds = array<i64: 1, 1, 128, 1>}]} {
    %c0 = arith.constant 0 : index
    %c0_0 = arith.constant 0 : index
    %c0_1 = arith.constant 0 : index
    %c0_2 = arith.constant 0 : index
    %0 = vector.load %arg2[%c0, %c0_0, %c0_1, %c0_2] : memref<1x1x160x136xbf16, #tpu.memory_space<vmem>>, vector<1x1x160x136xbf16>
    %1 = vector.shape_cast %0 : vector<1x1x160x136xbf16> to vector<160x136xbf16>
    %2 = vector.extract_strided_slice %1 {offsets = [0, 0], sizes = [160, 128], strides = [1, 1]} : vector<160x136xbf16> to vector<160x128xbf16>
    %3 = vector.extract_strided_slice %1 {offsets = [0, 1], sizes = [160, 128], strides = [1, 1]} : vector<160x136xbf16> to vector<160x128xbf16>
    %4 = vector.extract_strided_slice %1 {offsets = [0, 2], sizes = [160, 128], strides = [1, 1]} : vector<160x136xbf16> to vector<160x128xbf16>
    %5 = tpu.concatenate %2, %3, %4 in 0 : vector<160x128xbf16>, vector<160x128xbf16>, vector<160x128xbf16> -> vector<480x128xbf16>
    %c0_3 = arith.constant 0 : index
    %c0_4 = arith.constant 0 : index
    %6 = vector.load %arg3[%c0_3, %c0_4] : memref<512x480xbf16, #tpu.memory_space<vmem>>, vector<512x480xbf16>
    %cst = arith.constant dense<0.000000e+00> : vector<512x128xf32>
    %7 = tpu.matmul %6, %5, %cst {dimension_numbers = #tpu.dot_dimension_numbers<[1], [0], [0], [1], [0, 0, 1, 1], [], []>} : vector<512x480xbf16>, vector<480x128xbf16>, vector<512x128xf32> -> vector<512x128xf32>
    %8 = vector.extract_strided_slice %7 {offsets = [0, 0], sizes = [256, 128], strides = [1, 1]} : vector<512x128xf32> to vector<256x128xf32>
    %9 = vector.extract_strided_slice %7 {offsets = [256, 0], sizes = [256, 128], strides = [1, 1]} : vector<512x128xf32> to vector<256x128xf32>
    %10 = arith.mulf %8, %8 : vector<256x128xf32>
    %11 = arith.mulf %9, %9 : vector<256x128xf32>
    %12 = arith.addf %10, %11 : vector<256x128xf32>
    %c0_5 = arith.constant 0 : index
    %c0_6 = arith.constant 0 : index
    %13 = vector.load %arg4[%c0_5, %c0_6] : memref<128x256xbf16, #tpu.memory_space<vmem>>, vector<128x256xbf16>
    %14 = arith.truncf %12 : vector<256x128xf32> to vector<256x128xbf16>
    %cst_7 = arith.constant dense<0.000000e+00> : vector<128x128xf32>
    %15 = tpu.matmul %13, %14, %cst_7 {dimension_numbers = #tpu.dot_dimension_numbers<[1], [0], [0], [1], [0, 0, 1, 1], [], []>} : vector<128x256xbf16>, vector<256x128xbf16>, vector<128x128xf32> -> vector<128x128xf32>
    %cst_8 = arith.constant 9.99999993E-9 : f32
    %16 = vector.broadcast %cst_8 : f32 to vector<128x128xf32>
    %17 = arith.addf %15, %16 : vector<128x128xf32>
    %18 = math.log %17 : vector<128x128xf32>
    %cst_9 = arith.constant 0.434294492 : f32
    %19 = vector.broadcast %cst_9 : f32 to vector<128x128xf32>
    %20 = arith.mulf %18, %19 : vector<128x128xf32>
    %21 = vector.extract_strided_slice %20 {offsets = [0, 0], sizes = [80, 128], strides = [1, 1]} : vector<128x128xf32> to vector<80x128xf32>
    %c0_10 = arith.constant 0 : index
    %c0_11 = arith.constant 0 : index
    %c0_12 = arith.constant 0 : index
    %22 = vector.load %arg5[%c0_10, %c0_11, %c0_12] : memref<1x80x128xf32, #tpu.memory_space<vmem>>, vector<1x80x128xf32>
    %23 = vector.shape_cast %22 : vector<1x80x128xf32> to vector<80x128xf32>
    %24 = vector.shape_cast %21 : vector<80x128xf32> to vector<1x80x128xf32>
    tpu.vector_store %arg5[%c0_10, %c0_11, %c0_12], %24 {strides = array<i32>} : memref<1x80x128xf32, #tpu.memory_space<vmem>>, vector<1x80x128xf32>,
    %25 = tpu.iota {dimensions = array<i32: 1>} : vector<1x128xi32>
    %c128_i32 = arith.constant 128 : i32
    %26 = arith.muli %arg1, %c128_i32 : i32
    %27 = vector.broadcast %26 : i32 to vector<1x128xi32>
    %28 = arith.addi %25, %27 : vector<1x128xi32>
    %c11_i32 = arith.constant 11 : i32
    %29 = vector.broadcast %c11_i32 : i32 to vector<1x128xi32>
    %30 = arith.cmpi slt, %28, %29 : vector<1x128xi32>
    %cst_13 = arith.constant 0.000000e+00 : f32
    %31 = vector.shape_cast %30 : vector<1x128xi1> to vector<1x128xi1>
    %32 = vector.broadcast %31 : vector<1x128xi1> to vector<128x128xi1>
    %33 = vector.broadcast %cst_13 : f32 to vector<128x128xf32>
    %34 = arith.select %32, %20, %33 : vector<128x128xi1>, vector<128x128xf32>
    %cst_14 = arith.constant dense<0.000000e+00> : vector<128xf32>
    %35 = vector.multi_reduction <add>, %34, %cst_14 [1] : vector<128x128xf32> to vector<128xf32>
    %36 = vector.shape_cast %35 : vector<128xf32> to vector<128x1xf32>
    %c0_15 = arith.constant 0 : index
    %c0_16 = arith.constant 0 : index
    %c0_17 = arith.constant 0 : index
    %c0_18 = arith.constant 0 : index
    %37 = vector.load %arg6[%c0_15, %c0_16, %c0_17, %c0_18] : memref<1x1x128x1xf32, #tpu.memory_space<vmem>>, vector<1x1x128x1xf32>
    %38 = vector.shape_cast %37 : vector<1x1x128x1xf32> to vector<128x1xf32>
    %39 = vector.shape_cast %36 : vector<128x1xf32> to vector<1x1x128x1xf32>
    tpu.vector_store %arg6[%c0_15, %c0_16, %c0_17, %c0_18], %39 {strides = array<i32>} : memref<1x1x128x1xf32, #tpu.memory_space<vmem>>, vector<1x1x128x1xf32>,
    return
  }
  func.func @transform_0(%arg0: i32, %arg1: i32) -> (i32, i32, i32, i32) {
    %c0_i32 = arith.constant 0 : i32
    %c0_i32_0 = arith.constant 0 : i32
    %c0_i32_1 = arith.constant 0 : i32
    return %arg0, %arg1, %c0_i32, %c0_i32_0 : i32, i32, i32, i32
  }
  func.func @transform_1(%arg0: i32, %arg1: i32) -> (i32, i32) {
    %c0_i32 = arith.constant 0 : i32
    %c0_i32_0 = arith.constant 0 : i32
    %c0_i32_1 = arith.constant 0 : i32
    return %c0_i32, %c0_i32_0 : i32, i32
  }
  func.func @transform_2(%arg0: i32, %arg1: i32) -> (i32, i32) {
    %c0_i32 = arith.constant 0 : i32
    %c0_i32_0 = arith.constant 0 : i32
    %c0_i32_1 = arith.constant 0 : i32
    return %c0_i32, %c0_i32_0 : i32, i32
  }
  func.func @transform_3(%arg0: i32, %arg1: i32) -> (i32, i32, i32) {
    %c0_i32 = arith.constant 0 : i32
    %c0_i32_0 = arith.constant 0 : i32
    return %arg0, %c0_i32, %arg1 : i32, i32, i32
  }
  func.func @transform_4(%arg0: i32, %arg1: i32) -> (i32, i32, i32, i32) {
    %c0_i32 = arith.constant 0 : i32
    %c0_i32_0 = arith.constant 0 : i32
    %c0_i32_1 = arith.constant 0 : i32
    return %arg0, %arg1, %c0_i32, %c0_i32_0 : i32, i32, i32, i32
  }
}

</mosaic_0001>

<llo_original>
// kernel: reverse.1
$region0: #{reverse.1}
  %s0 = inlined_call_operand.vmem [shape: bf16[2,256], index: 0, kind: input, shape index: {}]
  %s1 = inlined_call_operand.vmem [shape: bf16[2,256], index: 1, kind: output, shape index: {}]
  %v2 = vlaneseq
  %v3 = vsub.s32 127, %v2
  %4 = vset.pattern.permute.xlu0 %v3
  $region1: #{reverse.1} parent=0
    #allocation0 [shape = 'u8[4096]{0}', space=vmem, size = 0x1000, scoped, tag = 'operand span for operand 0']
    #allocation1 [shape = 'u8[1024]{0}', space=vmem, size = 0x400, scoped, tag = 'packed  for operand 0']
    #allocation2 [shape = 'u8[4096]{0}', space=vmem, size = 0x1000, scoped, tag = 'operand span for operand 1']
    #allocation3 [shape = 'u8[1024]{0}', space=vmem, size = 0x400, scoped, tag = 'packed  for operand 1']
    loop: start=0, step=1, limit=4
    $region2: #{reverse.1} parent=1 // loop_pre_header
      _
    $region3: #{reverse.1} parent=1 // loop_header
      %s6 = sphi 0, %s10
      %p7 = scmp.ge.s32.totalorder %s6, 4
      %s13 = sphi 0, %s25
      %s14 = sphi 0, %s21
      %s15 = sphi 0, %s13
      %s16 = sphi 0, %s14
      %s17 = sphi 0, %s15
      %s18 = sphi 0, %s16
    $region4: #{reverse.1} parent=1 // loop_header_branch
      %9 = sbr.rel (%p7) target = $region8
    $region5: #{reverse.1} parent=1 // loop_body
      %s11 = ssub.s32 %s6, 1
      %s12 = ssub.s32 %s6, 2
      %s19 = sadd.s32 1, %s14
      %p20 = scmp.ge.s32.totalorder %s19, 2
      %s21 = scalar_select %p20, 0, %s19
      %s22 = sadd.s32 1, %s13
      %s23 = scalar_select %p20, %s22, %s13
      %p24 = scmp.ge.s32.totalorder %s23, 1
      %s25 = scalar_select %p24, 0, %s23
      %p26 = scmp.le.s32.totalorder 1, %s6
      %p27 = scmp.lt.s32.totalorder %s6, 3
      %p28 = pnand %p26, %p27
      %p29 = pneg %p28
      // Predicated region
      $region9: #{reverse.1} parent=5 // pred_check
        _
      $region10: #{reverse.1} parent=5 // pred_check_branch
        %31 = sbr.rel (%p28) target = $region12
      $region11: #{reverse.1} parent=5 // pred_region
        %s32 = ssub.s32 %s6, 1
      $region12: #{reverse.1} parent=5 // pred_fallthru
        _
      %p33 = scmp.lt.s32.totalorder %s6, 2
      // Predicated region
      $region13: #{reverse.1} parent=5 // pred_check
        %p34 = pneg %p33
      $region14: #{reverse.1} parent=5 // pred_check_branch
        %36 = sbr.rel (%p34) target = $region16
      $region15: #{reverse.1} parent=5 // pred_region
        %s37 = sand.u32 %s6, 1
        %s38 = sand.u32 %s6, 1
        %s39 = scalar_lea.vmem [#allocation1], %s38
        %s40 = ssub.s32 1, %s14
        %s41 = smul.addr %s13, 2
        %s42 = sadd.s32 %s40, %s41
        %s43 = scalar_lea.vmem %s0, %s42
        // Predicated region
        $region17: #{reverse.1} parent=15 // pred_check
          _
        $region18: #{reverse.1} parent=15 // pred_check_branch
          %45 = sbr.rel (0) target = $region20
        $region19: #{reverse.1} parent=15 // pred_region
          // Predicated region
          $region21: #{reverse.1} parent=19 // pred_check
            _
          $region22: #{reverse.1} parent=19 // pred_check_branch
            %47 = sbr.rel target = $region24
          $region23: #{reverse.1} parent=19 // pred_region
            // Predicated region
            $region36: #{reverse.1} parent=23 // pred_check
              _
            $region37: #{reverse.1} parent=23 // pred_check_branch
              %62 = sbr.rel (0) target = $region39
            $region38: #{reverse.1} parent=23 // pred_region
              loop: start=0, step=1, limit=1
              $region40: #{reverse.1} parent=38 // loop_pre_header
                _
              $region41: #{reverse.1} parent=38 // loop_header
                %s65 = sphi 0, %s69
                %p66 = scmp.ge.s32.totalorder %s65, 1
                %s70 = sphi %s43, %s43
                %s71 = sphi %s39, %s39
              $region42: #{reverse.1} parent=38 // loop_header_branch
                %68 = sbr.rel (%p66) target = $region46
              $region43: #{reverse.1} parent=38 // loop_body
                %v72 = vld [vmem:[%s70] sm:$0x1]
                %73 = vst [vmem:[%s71] sm:$0x1] %v72
              $region44: #{reverse.1} parent=38 // loop_footer
                %s69 = sadd.s32 1, %s65
              $region45: #{reverse.1} parent=38 // loop_footer_branch
                %64 = sbr.rel target = $region41
              $region46: #{reverse.1} parent=38 // loop_exit
                _
            $region39: #{reverse.1} parent=23 // pred_fallthru
              _
          $region24: #{reverse.1} parent=19 // pred_fallthru
            _
          // Predicated region
          $region25: #{reverse.1} parent=19 // pred_check
            _
          $region26: #{reverse.1} parent=19 // pred_check_branch
            %49 = sbr.rel (0) target = $region28
          $region27: #{reverse.1} parent=19 // pred_region
            loop: start=0, step=1, limit=1
            $region29: #{reverse.1} parent=27 // loop_pre_header
              _
            $region30: #{reverse.1} parent=27 // loop_header
              %s52 = sphi 0, %s56
              %p53 = scmp.ge.s32.totalorder %s52, 1
              %s57 = sphi %s43, %s43
              %s58 = sphi %s39, %s39
            $region31: #{reverse.1} parent=27 // loop_header_branch
              %55 = sbr.rel (%p53) target = $region35
            $region32: #{reverse.1} parent=27 // loop_body
              %v59 = vld [vmem:[%s57] sm:$0x1]
              %60 = vst [vmem:[%s58] sm:$0x1] %v59
            $region33: #{reverse.1} parent=27 // loop_footer
              %s56 = sadd.s32 1, %s52
            $region34: #{reverse.1} parent=27 // loop_footer_branch
              %51 = sbr.rel target = $region30
            $region35: #{reverse.1} parent=27 // loop_exit
              _
          $region28: #{reverse.1} parent=19 // pred_fallthru
            _
        $region20: #{reverse.1} parent=15 // pred_fallthru
          _
        %74 = vnop
      $region16: #{reverse.1} parent=5 // pred_fallthru
        _
      %p75 = scmp.le.s32.totalorder 1, %s6
      %p76 = scmp.lt.s32.totalorder %s6, 3
      %p77 = pnand %p75, %p76
      %p78 = pneg %p77
      // Predicated region
      $region47: #{reverse.1} parent=5 // pred_check
        _
      $region48: #{reverse.1} parent=5 // pred_check_branch
        %80 = sbr.rel (%p77) target = $region50
      $region49: #{reverse.1} parent=5 // pred_region
        %s81 = ssub.s32 %s6, 1
        %s82 = sand.u32 %s11, 1
        %s83 = sand.u32 %s11, 1
        %s84 = scalar_lea.vmem [#allocation1], %s83
        %s85 = sand.u32 %s11, 1
        %s86 = sand.u32 %s11, 1
        %s87 = scalar_lea.vmem [#allocation1], %s86
        %s88 = sand.u32 %s11, 1
        %s89 = sand.u32 %s11, 1
        %s90 = scalar_lea.vmem [#allocation3], %s89
        %s92 = smul.u32 1, 2
        %s93 = sshllo.u32 0, %s92
        %s94 = sshrl.u32 %s93, 1
        %s95 = sor.u32 %s93, %s94
        %s96 = sand.u32 %s95, 85
        %s97 = sshrl.u32 %s96, 1
        %s98 = sor.u32 %s96, %s97
        %s99 = sand.u32 51, %s98
        %s100 = sshrl.u32 %s99, 2
        %s101 = sor.u32 %s99, %s100
        %s102 = sand.u32 15, %s101
        %v103 = vld [vmem:[%s87] sm:%s102]
        %v104 = vunpack.c.l.bf16 %v103
        %v105 = vunpack.c.h.bf16 %v103
        %106 = vst [vmem:[#allocation0] sm:%s93] %v104
        %s107 = ssub.s32 1, %s16
        %v108 = vld [vmem:[#allocation0] sm:$0xff]
        %109 = vperm.xlu0 %4, %v108
        %v110 = vpop.permute.xlu0 %109
        %111 = vst [vmem:[#allocation2] sm:$0xff] %v110
        %s113 = smul.u32 1, 2
        %s114 = sshllo.u32 0, %s113
        %s115 = sshrl.u32 %s113, 1
        %v116 = vld [vmem:[#allocation2] sm:%s114]
        %v117 = vpack.c.bf16 0.0, %v116
        %s118 = sshllo.u32 0, %s115
        %119 = vst [vmem:[%s90] sm:%s118] %v117
        %s120 = sand.u32 %s11, 1
        %s121 = sand.u32 %s11, 1
        %s122 = scalar_lea.vmem [#allocation3], %s121
        %s123 = smul.addr %s15, 2
        %s124 = sadd.s32 %s16, %s123
        %s125 = scalar_lea.vmem %s1, %s124
        // Predicated region
        $region51: #{reverse.1} parent=49 // pred_check
          _
        $region52: #{reverse.1} parent=49 // pred_check_branch
          %127 = sbr.rel (0) target = $region54
        $region53: #{reverse.1} parent=49 // pred_region
          // Predicated region
          $region55: #{reverse.1} parent=53 // pred_check
            _
          $region56: #{reverse.1} parent=53 // pred_check_branch
            %129 = sbr.rel target = $region58
          $region57: #{reverse.1} parent=53 // pred_region
            // Predicated region
            $region70: #{reverse.1} parent=57 // pred_check
              _
            $region71: #{reverse.1} parent=57 // pred_check_branch
              %144 = sbr.rel (0) target = $region73
            $region72: #{reverse.1} parent=57 // pred_region
              loop: start=0, step=1, limit=1
              $region74: #{reverse.1} parent=72 // loop_pre_header
                _
              $region75: #{reverse.1} parent=72 // loop_header
                %s147 = sphi 0, %s151
                %p148 = scmp.ge.s32.totalorder %s147, 1
                %s152 = sphi %s122, %s122
                %s153 = sphi %s125, %s125
              $region76: #{reverse.1} parent=72 // loop_header_branch
                %150 = sbr.rel (%p148) target = $region80
              $region77: #{reverse.1} parent=72 // loop_body
                %v154 = vld [vmem:[%s152] sm:$0x1]
                %155 = vst [vmem:[%s153] sm:$0x1] %v154
              $region78: #{reverse.1} parent=72 // loop_footer
                %s151 = sadd.s32 1, %s147
              $region79: #{reverse.1} parent=72 // loop_footer_branch
                %146 = sbr.rel target = $region75
              $region80: #{reverse.1} parent=72 // loop_exit
                _
            $region73: #{reverse.1} parent=57 // pred_fallthru
              _
          $region58: #{reverse.1} parent=53 // pred_fallthru
            _
          // Predicated region
          $region59: #{reverse.1} parent=53 // pred_check
            _
          $region60: #{reverse.1} parent=53 // pred_check_branch
            %131 = sbr.rel (0) target = $region62
          $region61: #{reverse.1} parent=53 // pred_region
            loop: start=0, step=1, limit=1
            $region63: #{reverse.1} parent=61 // loop_pre_header
              _
            $region64: #{reverse.1} parent=61 // loop_header
              %s134 = sphi 0, %s138
              %p135 = scmp.ge.s32.totalorder %s134, 1
              %s139 = sphi %s122, %s122
              %s140 = sphi %s125, %s125
            $region65: #{reverse.1} parent=61 // loop_header_branch
              %137 = sbr.rel (%p135) target = $region69
            $region66: #{reverse.1} parent=61 // loop_body
              %v141 = vld [vmem:[%s139] sm:$0x1]
              %142 = vst [vmem:[%s140] sm:$0x1] %v141
            $region67: #{reverse.1} parent=61 // loop_footer
              %s138 = sadd.s32 1, %s134
            $region68: #{reverse.1} parent=61 // loop_footer_branch
              %133 = sbr.rel target = $region64
            $region69: #{reverse.1} parent=61 // loop_exit
              _
          $region62: #{reverse.1} parent=53 // pred_fallthru
            _
        $region54: #{reverse.1} parent=49 // pred_fallthru
          _
        %156 = vnop
      $region50: #{reverse.1} parent=5 // pred_fallthru
        _
      %p157 = scmp.le.s32.totalorder 2, %s6
      // Predicated region
      $region81: #{reverse.1} parent=5 // pred_check
        %p158 = pneg %p157
      $region82: #{reverse.1} parent=5 // pred_check_branch
        %160 = sbr.rel (%p158) target = $region84
      $region83: #{reverse.1} parent=5 // pred_region
        %s161 = ssub.s32 %s6, 2
        %s162 = sand.u32 %s12, 1
        %s163 = sand.u32 %s12, 1
        %s164 = scalar_lea.vmem [#allocation3], %s163
      $region84: #{reverse.1} parent=5 // pred_fallthru
        _
    $region6: #{reverse.1} parent=1 // loop_footer
      %s10 = sadd.s32 1, %s6
    $region7: #{reverse.1} parent=1 // loop_footer_branch
      %5 = sbr.rel target = $region3
    $region8: #{reverse.1} parent=1 // loop_exit
      _

</llo_original>
